<compile_context>
chip_gen: v6e
topology: v6e:2x2x1
jax: 0.10.0
libtpu: 0.0.40
codegen_flags: <defaults>
</compile_context>

<pallas_src>
import jax
import jax.numpy as jnp
from jax.experimental import pallas as pl
from jax.experimental.pallas import tpu as pltpu

LANE = 128     # lane-dense feature width
SUBLANE = 8    # sublane alignment for node counts


def _round_up(n, m):
    return ((n + m - 1) // m) * m


def _pad2d(a, rows, cols, dtype):
    out = jnp.zeros((rows, cols), dtype=dtype)
    return out.at[: a.shape[0], : a.shape[1]].set(a.astype(dtype))


def _dist_sage_kernel(x_ref, a1_ref, a2_ref, a3_ref,
                      w1_ref, w2_ref, w3_ref,
                      b1_ref, b2_ref, b3_ref, o_ref):
    """Fused 3-layer SAGEConv('mean') forward. All refs are full-array VMEM tiles.

    Per layer: out = concat([h_dst, A @ h], axis=1) @ [W_self; W_neigh] + bias  (+ReLU)
    """

    def layer(a_ref, w_ref, b_ref, h, apply_relu):
        n_dst = a_ref.shape[0]                       # static (padded) dst count
        h_bf = h.astype(jnp.bfloat16)                # MXU inputs in bf16
        # mean aggregation over neighbors: (dst, src) @ (src, F) -> (dst, F), f32 acc
        agg = jnp.dot(a_ref[...], h_bf, preferred_element_type=jnp.float32)
        # dst nodes are the first n_dst src nodes (static in-kernel view, no extra DMA)
        cat = jnp.concatenate(
            [h_bf[:n_dst, :], agg.astype(jnp.bfloat16)], axis=1)   # (dst, 2F)
        # single fused matmul against [W_self; W_neigh]; bias/ReLU in f32
        out = jnp.dot(cat, w_ref[...], preferred_element_type=jnp.float32) + b_ref[...]
        if apply_relu:
            out = jnp.maximum(out, 0.0)
        return out

    h = x_ref[...]                                   # (n0_pad, F) bf16
    h = layer(a1_ref, w1_ref, b1_ref, h, apply_relu=True)
    h = layer(a2_ref, w2_ref, b2_ref, h, apply_relu=True)   # dropout == identity (eval)
    h = layer(a3_ref, w3_ref, b3_ref, h, apply_relu=False)
    o_ref[...] = h.astype(o_ref.dtype)


def dist_sage_forward(blocks, x, params):
    """Fused DistSAGE forward.

    blocks: list of 3 row-normalized dense adjacencies (n_dst_i, n_src_i).
    x:      (n_src_0, in_feats) f32 source-node features.
    params: list of 3 tuples (w_self (f_in,f_out), w_neigh (f_in,f_out), bias (1,f_out)).
    returns (n_dst_last, n_classes) f32.
    """
    assert len(blocks) == 3 and len(params) == 3
    n0 = x.shape[0]
    n_dst_last = blocks[-1].shape[0]
    f_out_last = params[-1][0].shape[1]

    F = LANE
    # padded node counts per "level": level 0 = input src nodes, level i = dst of layer i
    n_pad = [_round_up(n0, SUBLANE)] + [_round_up(b.shape[0], SUBLANE) for b in blocks]

    # Pad + cast inputs (bf16 for everything fed to the MXU; bias stays f32).
    x_p = _pad2d(x, n_pad[0], F, jnp.bfloat16)
    a_p = [_pad2d(b, n_pad[i + 1], n_pad[i], jnp.bfloat16) for i, b in enumerate(blocks)]
    w_p, b_p = [], []
    for (w_self, w_neigh, bias) in params:
        ws = _pad2d(w_self, F, F, jnp.bfloat16)
        wn = _pad2d(w_neigh, F, F, jnp.bfloat16)
        w_p.append(jnp.concatenate([ws, wn], axis=0))            # (2F, F) = [W_self; W_neigh]
        b_p.append(_pad2d(bias.reshape(1, -1), 1, F, jnp.float32))

    full = lambda shape: pl.BlockSpec(shape, lambda: (0,) * len(shape))

    out_pad = pl.pallas_call(
        _dist_sage_kernel,
        out_shape=jax.ShapeDtypeStruct((n_pad[3], F), jnp.float32),
        in_specs=([full(x_p.shape)]
                  + [full(a.shape) for a in a_p]
                  + [full(w.shape) for w in w_p]
                  + [full(b.shape) for b in b_p]),
        out_specs=full((n_pad[3], F)),
        compiler_params=pltpu.CompilerParams(vmem_limit_bytes=16 * 1024 * 1024),
    )(x_p, *a_p, *w_p, *b_p)

    return out_pad[:n_dst_last, :f_out_last]


def _make_block(key, n_dst, n_src):
    """Random bipartite block; dst nodes are the first n_dst src nodes.

    Returns dense row-normalized adjacency. Only actual neighbors are averaged
    (no forced self-loop); zero-in-degree rows give a zero mean, like DGL.
    """
    adj = (jax.random.uniform(key, (n_dst, n_src)) < 0.4).astype(jnp.float32)
    deg = jnp.sum(adj, axis=1, keepdims=True)
    return adj / jnp.maximum(deg, 1.0)


def _init_linear(key, f_in, f_out, scale=0.1):
    return scale * jax.random.normal(key, (f_in, f_out), dtype=jnp.float32)


if __name__ == "__main__":
    in_feats, n_hidden, n_classes = 16, 32, 8
    # fan-out sizes: src_0=32 input nodes -> 24 -> 16 -> 8 output nodes
    sizes = [32, 24, 16, 8]

    key = jax.random.PRNGKey(0)
    keys = jax.random.split(key, 16)

    x = jax.random.normal(keys[0], (sizes[0], in_feats), dtype=jnp.float32)

    blocks = [
        _make_block(keys[1], sizes[1], sizes[0]),
        _make_block(keys[2], sizes[2], sizes[1]),
        _make_block(keys[3], sizes[3], sizes[2]),
    ]

    dims = [(in_feats, n_hidden), (n_hidden, n_hidden), (n_hidden, n_classes)]
    params = []
    k = 4
    for (fi, fo) in dims:
        w_self = _init_linear(keys[k], fi, fo); k += 1
        w_neigh = _init_linear(keys[k], fi, fo); k += 1
        bias = 0.01 * jnp.ones((1, fo), dtype=jnp.float32)
        params.append((w_self, w_neigh, bias))

    out = dist_sage_forward(blocks, x, params)
    jax.block_until_ready(out)
    assert out.shape == (sizes[-1], n_classes)
    assert bool(jnp.all(jnp.isfinite(out)))
    print("KERNEL_OK")
</pallas_src>

<mosaic_0001>
module attributes {stable_mosaic.version = 11 : i64} {
  func.func @_dist_sage_kernel(%arg0: memref<32x128xbf16, #tpu.memory_space<vmem>>, %arg1: memref<24x32xbf16, #tpu.memory_space<vmem>>, %arg2: memref<16x24xbf16, #tpu.memory_space<vmem>>, %arg3: memref<8x16xbf16, #tpu.memory_space<vmem>>, %arg4: memref<256x128xbf16, #tpu.memory_space<vmem>>, %arg5: memref<256x128xbf16, #tpu.memory_space<vmem>>, %arg6: memref<256x128xbf16, #tpu.memory_space<vmem>>, %arg7: memref<1x128xf32, #tpu.memory_space<vmem>>, %arg8: memref<1x128xf32, #tpu.memory_space<vmem>>, %arg9: memref<1x128xf32, #tpu.memory_space<vmem>>, %arg10: memref<8x128xf32, #tpu.memory_space<vmem>>) attributes {dimension_semantics = [], scalar_prefetch = 0 : i64, scratch_operands = 0 : i64, tpu.core_type = #tpu.core_type<tc>} {
    %c0 = arith.constant 0 : index
    %c0_0 = arith.constant 0 : index
    %0 = vector.load %arg0[%c0, %c0_0] : memref<32x128xbf16, #tpu.memory_space<vmem>>, vector<32x128xbf16>
    %c0_1 = arith.constant 0 : index
    %c0_2 = arith.constant 0 : index
    %1 = vector.load %arg1[%c0_1, %c0_2] : memref<24x32xbf16, #tpu.memory_space<vmem>>, vector<24x32xbf16>
    %cst = arith.constant dense<0.000000e+00> : vector<24x128xf32>
    %2 = tpu.matmul %1, %0, %cst {dimension_numbers = #tpu.dot_dimension_numbers<[1], [0], [0], [1], [0, 0, 1, 1], [], []>} : vector<24x32xbf16>, vector<32x128xbf16>, vector<24x128xf32> -> vector<24x128xf32>
    %3 = vector.extract_strided_slice %0 {offsets = [0, 0], sizes = [24, 128], strides = [1, 1]} : vector<32x128xbf16> to vector<24x128xbf16>
    %4 = arith.truncf %2 : vector<24x128xf32> to vector<24x128xbf16>
    %5 = tpu.concatenate %3, %4 in 1 : vector<24x128xbf16>, vector<24x128xbf16> -> vector<24x256xbf16>
    %c0_3 = arith.constant 0 : index
    %c0_4 = arith.constant 0 : index
    %6 = vector.load %arg4[%c0_3, %c0_4] : memref<256x128xbf16, #tpu.memory_space<vmem>>, vector<256x128xbf16>
    %cst_5 = arith.constant dense<0.000000e+00> : vector<24x128xf32>
    %7 = tpu.matmul %5, %6, %cst_5 {dimension_numbers = #tpu.dot_dimension_numbers<[1], [0], [0], [1], [0, 0, 1, 1], [], []>} : vector<24x256xbf16>, vector<256x128xbf16>, vector<24x128xf32> -> vector<24x128xf32>
    %c0_6 = arith.constant 0 : index
    %c0_7 = arith.constant 0 : index
    %8 = vector.load %arg7[%c0_6, %c0_7] : memref<1x128xf32, #tpu.memory_space<vmem>>, vector<1x128xf32>
    %9 = vector.broadcast %8 : vector<1x128xf32> to vector<24x128xf32>
    %10 = arith.addf %7, %9 : vector<24x128xf32>
    %cst_8 = arith.constant 0.000000e+00 : f32
    %11 = vector.broadcast %cst_8 : f32 to vector<24x128xf32>
    %12 = arith.maximumf %10, %11 : vector<24x128xf32>
    %13 = arith.truncf %12 : vector<24x128xf32> to vector<24x128xbf16>
    %c0_9 = arith.constant 0 : index
    %c0_10 = arith.constant 0 : index
    %14 = vector.load %arg2[%c0_9, %c0_10] : memref<16x24xbf16, #tpu.memory_space<vmem>>, vector<16x24xbf16>
    %cst_11 = arith.constant dense<0.000000e+00> : vector<16x128xf32>
    %15 = tpu.matmul %14, %13, %cst_11 {dimension_numbers = #tpu.dot_dimension_numbers<[1], [0], [0], [1], [0, 0, 1, 1], [], []>} : vector<16x24xbf16>, vector<24x128xbf16>, vector<16x128xf32> -> vector<16x128xf32>
    %16 = vector.extract_strided_slice %13 {offsets = [0, 0], sizes = [16, 128], strides = [1, 1]} : vector<24x128xbf16> to vector<16x128xbf16>
    %17 = arith.truncf %15 : vector<16x128xf32> to vector<16x128xbf16>
    %18 = tpu.concatenate %16, %17 in 1 : vector<16x128xbf16>, vector<16x128xbf16> -> vector<16x256xbf16>
    %c0_12 = arith.constant 0 : index
    %c0_13 = arith.constant 0 : index
    %19 = vector.load %arg5[%c0_12, %c0_13] : memref<256x128xbf16, #tpu.memory_space<vmem>>, vector<256x128xbf16>
    %cst_14 = arith.constant dense<0.000000e+00> : vector<16x128xf32>
    %20 = tpu.matmul %18, %19, %cst_14 {dimension_numbers = #tpu.dot_dimension_numbers<[1], [0], [0], [1], [0, 0, 1, 1], [], []>} : vector<16x256xbf16>, vector<256x128xbf16>, vector<16x128xf32> -> vector<16x128xf32>
    %c0_15 = arith.constant 0 : index
    %c0_16 = arith.constant 0 : index
    %21 = vector.load %arg8[%c0_15, %c0_16] : memref<1x128xf32, #tpu.memory_space<vmem>>, vector<1x128xf32>
    %22 = vector.broadcast %21 : vector<1x128xf32> to vector<16x128xf32>
    %23 = arith.addf %20, %22 : vector<16x128xf32>
    %cst_17 = arith.constant 0.000000e+00 : f32
    %24 = vector.broadcast %cst_17 : f32 to vector<16x128xf32>
    %25 = arith.maximumf %23, %24 : vector<16x128xf32>
    %26 = arith.truncf %25 : vector<16x128xf32> to vector<16x128xbf16>
    %c0_18 = arith.constant 0 : index
    %c0_19 = arith.constant 0 : index
    %27 = vector.load %arg3[%c0_18, %c0_19] : memref<8x16xbf16, #tpu.memory_space<vmem>>, vector<8x16xbf16>
    %cst_20 = arith.constant dense<0.000000e+00> : vector<8x128xf32>
    %28 = tpu.matmul %27, %26, %cst_20 {dimension_numbers = #tpu.dot_dimension_numbers<[1], [0], [0], [1], [0, 0, 1, 1], [], []>} : vector<8x16xbf16>, vector<16x128xbf16>, vector<8x128xf32> -> vector<8x128xf32>
    %29 = vector.extract_strided_slice %26 {offsets = [0, 0], sizes = [8, 128], strides = [1, 1]} : vector<16x128xbf16> to vector<8x128xbf16>
    %30 = arith.truncf %28 : vector<8x128xf32> to vector<8x128xbf16>
    %31 = tpu.concatenate %29, %30 in 1 : vector<8x128xbf16>, vector<8x128xbf16> -> vector<8x256xbf16>
    %c0_21 = arith.constant 0 : index
    %c0_22 = arith.constant 0 : index
    %32 = vector.load %arg6[%c0_21, %c0_22] : memref<256x128xbf16, #tpu.memory_space<vmem>>, vector<256x128xbf16>
    %cst_23 = arith.constant dense<0.000000e+00> : vector<8x128xf32>
    %33 = tpu.matmul %31, %32, %cst_23 {dimension_numbers = #tpu.dot_dimension_numbers<[1], [0], [0], [1], [0, 0, 1, 1], [], []>} : vector<8x256xbf16>, vector<256x128xbf16>, vector<8x128xf32> -> vector<8x128xf32>
    %c0_24 = arith.constant 0 : index
    %c0_25 = arith.constant 0 : index
    %34 = vector.load %arg9[%c0_24, %c0_25] : memref<1x128xf32, #tpu.memory_space<vmem>>, vector<1x128xf32>
    %35 = vector.broadcast %34 : vector<1x128xf32> to vector<8x128xf32>
    %36 = arith.addf %33, %35 : vector<8x128xf32>
    %c0_26 = arith.constant 0 : index
    %c0_27 = arith.constant 0 : index
    %37 = vector.load %arg10[%c0_26, %c0_27] : memref<8x128xf32, #tpu.memory_space<vmem>>, vector<8x128xf32>
    tpu.vector_store %arg10[%c0_26, %c0_27], %36 {strides = array<i32>} : memref<8x128xf32, #tpu.memory_space<vmem>>, vector<8x128xf32>,
    return
  }
}

</mosaic_0001>

<llo_original>
// kernel: tpu_custom_call.1
$region0: #{tpu_custom_call.1}
  #allocation0 [shape = 'u32[]', space=smem, size = 0x4, offset = 0x4, fixed_abs, tag = 'smem constant byte address 0x4 - core index']
  #allocation1 [shape = 'u32[144,128]{1,0:T(1,128)}', space=vmem, size = 0x12000, scoped, tag = 'internal scratch']
  %s0 = inlined_call_operand.hbm [shape: bf16[32,128], index: 0, kind: input, shape index: {}]
  %s1 = inlined_call_operand.hbm [shape: bf16[24,32], index: 1, kind: input, shape index: {}]
  %s2 = inlined_call_operand.hbm [shape: bf16[16,24], index: 2, kind: input, shape index: {}]
  %s3 = inlined_call_operand.vmem [shape: bf16[8,16], index: 3, kind: input, shape index: {}]
  %s4 = inlined_call_operand.hbm [shape: bf16[256,128], index: 4, kind: input, shape index: {}]
  %s5 = inlined_call_operand.hbm [shape: bf16[256,128], index: 5, kind: input, shape index: {}]
  %s6 = inlined_call_operand.hbm [shape: bf16[256,128], index: 6, kind: input, shape index: {}]
  %s7 = inlined_call_operand.vmem [shape: f32[1,128], index: 7, kind: input, shape index: {}]
  %s8 = inlined_call_operand.vmem [shape: f32[1,128], index: 8, kind: input, shape index: {}]
  %s9 = inlined_call_operand.vmem [shape: f32[1,128], index: 9, kind: input, shape index: {}]
  %s10 = inlined_call_operand.hbm [shape: f32[8,128], index: 10, kind: output, shape index: {}]
  %s11 = sld [smem:[#allocation0]]
  $region74: #{tpu_custom_call.1} parent=0
    _
  %s13 = ssub.s32 1, %s11
  %s14 = scalar_select 0, %s13, %s11
  $region1: #{tpu_custom_call.1} parent=0
    #allocation2 [shape = 'u8[8192]{0}', space=vmem, size = 0x2000, scoped, tag = 'input window, operand 0, single buffered']
    #allocation3 [shape = 's32[1]{0}', space=sflag, size = 0x4, scoped, tag = 'scoped memory for tpu_custom_call.1']
    #allocation4 [shape = 's32[1]{0}', space=sflag, size = 0x4, scoped, tag = 'scoped memory for tpu_custom_call.1']
    #allocation5 [shape = 'u8[6144]{0}', space=vmem, size = 0x1800, scoped, tag = 'input window, operand 1, single buffered']
    #allocation6 [shape = 's32[1]{0}', space=sflag, size = 0x4, scoped, tag = 'scoped memory for tpu_custom_call.1']
    #allocation7 [shape = 'u8[4096]{0}', space=vmem, size = 0x1000, scoped, tag = 'input window, operand 2, single buffered']
    #allocation8 [shape = 'u8[65536]{0}', space=vmem, size = 0x10000, scoped, tag = 'input window, operand 4, single buffered']
    #allocation9 [shape = 's32[1]{0}', space=sflag, size = 0x4, scoped, tag = 'scoped memory for tpu_custom_call.1']
    #allocation10 [shape = 'u8[65536]{0}', space=vmem, size = 0x10000, scoped, tag = 'input window, operand 5, single buffered']
    #allocation11 [shape = 'u8[65536]{0}', space=vmem, size = 0x10000, scoped, tag = 'input window, operand 6, single buffered']
    #allocation12 [shape = 's32[1]{0}', space=sflag, size = 0x4, scoped, tag = 'scoped memory for tpu_custom_call.1']
    #allocation13 [shape = 'u8[4096]{0}', space=vmem, size = 0x1000, scoped, tag = 'output window, operand 0, single buffered']
    %15 = vsyncpa [#allocation3], 0
    %16 = vsyncpa [#allocation6], 0
    %17 = vsyncpa [#allocation9], 0
    %18 = vsyncpa [#allocation12], 0
    %19 = vsyncpa [#allocation4], 0
    // Predicated region
    $region2: #{tpu_custom_call.1} parent=1 // pred_check
      _
    $region3: #{tpu_custom_call.1} parent=1 // pred_check_branch
      %21 = sbr.rel (0) target = $region5
    $region4: #{tpu_custom_call.1} parent=1 // pred_region
      %s23 = ssub.s32 256, 256
      %24 = vsyncadd [#allocation3], %s23
      %s25 = sshll.u32 [#allocation2], 4
      %s26 = int_to_ptr.vmem [resolvable:$true] %s25
      %31 = dma.hbm_to_vmem [thread:$0]  %s0, 256, %s26, [#allocation3], 64, 64, 4
    $region5: #{tpu_custom_call.1} parent=1 // pred_fallthru
      _
    // Predicated region
    $region6: #{tpu_custom_call.1} parent=1 // pred_check
      _
    $region7: #{tpu_custom_call.1} parent=1 // pred_check_branch
      %33 = sbr.rel (0) target = $region9
    $region8: #{tpu_custom_call.1} parent=1 // pred_region
      %s35 = ssub.s32 192, 192
      %36 = vsyncadd [#allocation6], %s35
      %s37 = sshll.u32 [#allocation5], 4
      %s38 = int_to_ptr.vmem [resolvable:$true] %s37
      %43 = dma.hbm_to_vmem [thread:$0]  %s1, 192, %s38, [#allocation6], 64, 64, 4
    $region9: #{tpu_custom_call.1} parent=1 // pred_fallthru
      _
    // Predicated region
    $region10: #{tpu_custom_call.1} parent=1 // pred_check
      _
    $region11: #{tpu_custom_call.1} parent=1 // pred_check_branch
      %45 = sbr.rel (0) target = $region13
    $region12: #{tpu_custom_call.1} parent=1 // pred_region
      %s47 = ssub.s32 128, 128
      %48 = vsyncadd [#allocation6], %s47
      %s49 = sshll.u32 [#allocation7], 4
      %s50 = int_to_ptr.vmem [resolvable:$true] %s49
      %55 = dma.hbm_to_vmem [thread:$0]  %s2, 128, %s50, [#allocation6], 64, 64, 4
    $region13: #{tpu_custom_call.1} parent=1 // pred_fallthru
      _
    // Predicated region
    $region14: #{tpu_custom_call.1} parent=1 // pred_check
      _
    $region15: #{tpu_custom_call.1} parent=1 // pred_check_branch
      %57 = sbr.rel (0) target = $region17
    $region16: #{tpu_custom_call.1} parent=1 // pred_region
      _
    $region17: #{tpu_custom_call.1} parent=1 // pred_fallthru
      _
    // Predicated region
    $region18: #{tpu_custom_call.1} parent=1 // pred_check
      _
    $region19: #{tpu_custom_call.1} parent=1 // pred_check_branch
      %59 = sbr.rel (0) target = $region21
    $region20: #{tpu_custom_call.1} parent=1 // pred_region
      %s61 = ssub.s32 2048, 2048
      %62 = vsyncadd [#allocation9], %s61
      %s63 = sshll.u32 [#allocation8], 4
      %s64 = int_to_ptr.vmem [resolvable:$true] %s63
      %69 = dma.hbm_to_vmem [thread:$0]  %s4, 2048, %s64, [#allocation9], 64, 64, 4
    $region21: #{tpu_custom_call.1} parent=1 // pred_fallthru
      _
    // Predicated region
    $region22: #{tpu_custom_call.1} parent=1 // pred_check
      _
    $region23: #{tpu_custom_call.1} parent=1 // pred_check_branch
      %71 = sbr.rel (0) target = $region25
    $region24: #{tpu_custom_call.1} parent=1 // pred_region
      %s73 = ssub.s32 2048, 2048
      %74 = vsyncadd [#allocation9], %s73
      %s75 = sshll.u32 [#allocation10], 4
      %s76 = int_to_ptr.vmem [resolvable:$true] %s75
      %81 = dma.hbm_to_vmem [thread:$0]  %s5, 2048, %s76, [#allocation9], 64, 64, 4
    $region25: #{tpu_custom_call.1} parent=1 // pred_fallthru
      _
    // Predicated region
    $region26: #{tpu_custom_call.1} parent=1 // pred_check
      _
    $region27: #{tpu_custom_call.1} parent=1 // pred_check_branch
      %83 = sbr.rel (0) target = $region29
    $region28: #{tpu_custom_call.1} parent=1 // pred_region
      %s85 = ssub.s32 2048, 2048
      %86 = vsyncadd [#allocation12], %s85
      %s87 = sshll.u32 [#allocation11], 4
      %s88 = int_to_ptr.vmem [resolvable:$true] %s87
      %93 = dma.hbm_to_vmem [thread:$0]  %s6, 2048, %s88, [#allocation12], 64, 64, 4
    $region29: #{tpu_custom_call.1} parent=1 // pred_fallthru
      _
    // Predicated region
    $region30: #{tpu_custom_call.1} parent=1 // pred_check
      _
    $region31: #{tpu_custom_call.1} parent=1 // pred_check_branch
      %95 = sbr.rel (0) target = $region33
    $region32: #{tpu_custom_call.1} parent=1 // pred_region
      _
    $region33: #{tpu_custom_call.1} parent=1 // pred_fallthru
      _
    // Predicated region
    $region34: #{tpu_custom_call.1} parent=1 // pred_check
      _
    $region35: #{tpu_custom_call.1} parent=1 // pred_check_branch
      %97 = sbr.rel (0) target = $region37
    $region36: #{tpu_custom_call.1} parent=1 // pred_region
      _
    $region37: #{tpu_custom_call.1} parent=1 // pred_fallthru
      _
    // Predicated region
    $region38: #{tpu_custom_call.1} parent=1 // pred_check
      _
    $region39: #{tpu_custom_call.1} parent=1 // pred_check_branch
      %99 = sbr.rel (0) target = $region41
    $region40: #{tpu_custom_call.1} parent=1 // pred_region
      _
    $region41: #{tpu_custom_call.1} parent=1 // pred_fallthru
      _
    // Predicated region
    $region42: #{tpu_custom_call.1} parent=1 // pred_check
      _
    $region43: #{tpu_custom_call.1} parent=1 // pred_check_branch
      %101 = sbr.rel (0) target = $region45
    $region44: #{tpu_custom_call.1} parent=1 // pred_region
      %102 = dma.done [#allocation3], 256
    $region45: #{tpu_custom_call.1} parent=1 // pred_fallthru
      _
    // Predicated region
    $region46: #{tpu_custom_call.1} parent=1 // pred_check
      _
    $region47: #{tpu_custom_call.1} parent=1 // pred_check_branch
      %104 = sbr.rel (0) target = $region49
    $region48: #{tpu_custom_call.1} parent=1 // pred_region
      %105 = dma.done [#allocation6], 192
    $region49: #{tpu_custom_call.1} parent=1 // pred_fallthru
      _
    // Predicated region
    $region50: #{tpu_custom_call.1} parent=1 // pred_check
      _
    $region51: #{tpu_custom_call.1} parent=1 // pred_check_branch
      %107 = sbr.rel (0) target = $region53
    $region52: #{tpu_custom_call.1} parent=1 // pred_region
      %108 = dma.done [#allocation6], 128
    $region53: #{tpu_custom_call.1} parent=1 // pred_fallthru
      _
    // Predicated region
    $region54: #{tpu_custom_call.1} parent=1 // pred_check
      _
    $region55: #{tpu_custom_call.1} parent=1 // pred_check_branch
      %110 = sbr.rel (0) target = $region57
    $region56: #{tpu_custom_call.1} parent=1 // pred_region
      %111 = dma.done [#allocation9], 2048
    $region57: #{tpu_custom_call.1} parent=1 // pred_fallthru
      _
    // Predicated region
    $region58: #{tpu_custom_call.1} parent=1 // pred_check
      _
    $region59: #{tpu_custom_call.1} parent=1 // pred_check_branch
      %113 = sbr.rel (0) target = $region61
    $region60: #{tpu_custom_call.1} parent=1 // pred_region
      %114 = dma.done [#allocation9], 2048
    $region61: #{tpu_custom_call.1} parent=1 // pred_fallthru
      _
    // Predicated region
    $region62: #{tpu_custom_call.1} parent=1 // pred_check
      _
    $region63: #{tpu_custom_call.1} parent=1 // pred_check_branch
      %116 = sbr.rel (0) target = $region65
    $region64: #{tpu_custom_call.1} parent=1 // pred_region
      %117 = dma.done [#allocation12], 2048
    $region65: #{tpu_custom_call.1} parent=1 // pred_fallthru
      _
    %v119 = vld [vmem:[#allocation2] sm:$0xf]
    %v120 = vld [vmem:[#allocation2 + $0x4] sm:$0xf]
    %v121 = vld [vmem:[#allocation2 + $0x8] sm:$0xf]
    %v122 = vld [vmem:[#allocation2 + $0xc] sm:$0xf]
    %v123 = vld [vmem:[#allocation5] sm:$0xf]
    %v124 = vld [vmem:[#allocation5 + $0x4] sm:$0xf]
    %v125 = vld [vmem:[#allocation5 + $0x8] sm:$0xf]
    %v129 = vunpack.c.l.b16 %v123
    %v130 = vunpack.c.l.b16 %v124
    %v131 = vunpack.c.l.b16 %v125
    %v132 = vpack.c.b16 %v130, %v129
    %v133 = vpack.c.b16 %v131, %v131
    %v138 = vunpack.c.l.b16 %v119
    %v139 = vunpack.c.l.b16 %v120
    %v140 = vunpack.c.l.b16 %v121
    %v141 = vunpack.c.l.b16 %v122
    %v142 = vpack.c.b16 %v139, %v138
    %v143 = vpack.c.b16 %v141, %v140
    %vm146 = vcmask 261120
    %v148 = vsel %vm146, %v132, 0
    %v151 = vsel %vm146, %v133, 0
    %153 = vmatprep.subr.bf16.mxu0 0
    %154 = vmatpush1.bf16.msra.mxu0 0
    %155 = vmatprep.subr.bf16.mxu0 0
    %156 = vmatpush1.bf16.msra.mxu0 0
    %157 = vmatprep.subr.bf16.mxu0 0
    %158 = vmatpush1.bf16.msra.mxu0 0
    %159 = vmatprep.subr.bf16.mxu0 0
    %160 = vmatpush1.bf16.msra.mxu0 0
    %161 = vmatprep.subr.bf16.mxu0 0
    %162 = vmatpush1.bf16.msra.mxu0 0
    %163 = vmatprep.subr.bf16.mxu0 0
    %164 = vmatpush1.bf16.msra.mxu0 0
    %165 = vmatprep.subr.bf16.mxu0 0
    %166 = vmatpush1.bf16.msra.mxu0 %v143
    %167 = vmatprep.subr.bf16.mxu0 0
    %168 = vmatpush1.bf16.msra.mxu0 %v142
    %169 = vmatprep.subr.bf16.mxu0 0
    %170 = vmatpush2.bf16.msra.mxu0 0
    %171 = vmatprep.subr.bf16.mxu0 0
    %172 = vmatpush2.bf16.msra.mxu0 0
    %173 = vmatprep.subr.bf16.mxu0 0
    %174 = vmatpush2.bf16.msra.mxu0 0
    %175 = vmatprep.subr.bf16.mxu0 0
    %176 = vmatpush2.bf16.msra.mxu0 0
    %177 = vmatprep.subr.bf16.mxu0 0
    %178 = vmatpush2.bf16.msra.mxu0 0
    %179 = vmatprep.subr.bf16.mxu0 0
    %180 = vmatpush2.bf16.msra.mxu0 0
    %181 = vmatprep.subr.bf16.mxu0 0
    %182 = vmatpush2.bf16.msra.mxu0 0
    %183 = vmatprep.subr.bf16.mxu0 0
    %184 = vmatpush2.bf16.msra.mxu0 0
    %185 = vmatprep.mubr.bf16.mxu0 0
    %186 = vmatmul.mubr.bf16.gmra.mxu0 %v148
    %v187 = vpop.f32.mrf.mxu0
    %v188 = vadd.f32 0.0, %v187
    %v189 = vpop.f32.mrf.mxu0
    %v190 = vpop.f32.mrf.mxu0
    %v191 = vadd.f32 0.0, %v190
    %v192 = vpop.f32.mrf.mxu0
    %193 = vmatprep.mubr.bf16.mxu0 0
    %194 = vmatmul.mubr.bf16.gmra.mxu0 %v151
    %v195 = vpop.f32.mrf.mxu0
    %v196 = vadd.f32 0.0, %v195
    %v197 = vpop.f32.mrf.mxu0
    %v198 = vpop.f32.mrf.mxu0
    %v199 = vpop.f32.mrf.mxu0
    %200 = vdwg.mxu0
    %v201 = vpack.c.bf16 %v191, %v188
    %v202 = vpack.c.bf16 %v196, %v196
    %v203 = vpack.c.b16 %v140, %v140
    %v205 = vld [vmem:[#allocation8] sm:$0xf]
    %v206 = vld [vmem:[#allocation8 + $0x4] sm:$0xf]
    %v207 = vld [vmem:[#allocation8 + $0x8] sm:$0xf]
    %v208 = vld [vmem:[#allocation8 + $0xc] sm:$0xf]
    %v209 = vld [vmem:[#allocation8 + $0x10] sm:$0xf]
    %v210 = vld [vmem:[#allocation8 + $0x14] sm:$0xf]
    %v211 = vld [vmem:[#allocation8 + $0x18] sm:$0xf]
    %v212 = vld [vmem:[#allocation8 + $0x1c] sm:$0xf]
    %v213 = vld [vmem:[#allocation8 + $0x20] sm:$0xf]
    %v214 = vld [vmem:[#allocation8 + $0x24] sm:$0xf]
    %v215 = vld [vmem:[#allocation8 + $0x28] sm:$0xf]
    %v216 = vld [vmem:[#allocation8 + $0x2c] sm:$0xf]
    %v217 = vld [vmem:[#allocation8 + $0x30] sm:$0xf]
    %v218 = vld [vmem:[#allocation8 + $0x34] sm:$0xf]
    %v219 = vld [vmem:[#allocation8 + $0x38] sm:$0xf]
    %v220 = vld [vmem:[#allocation8 + $0x3c] sm:$0xf]
    %v221 = vld [vmem:[#allocation8 + $0x40] sm:$0xf]
    %v222 = vld [vmem:[#allocation8 + $0x44] sm:$0xf]
    %v223 = vld [vmem:[#allocation8 + $0x48] sm:$0xf]
    %v224 = vld [vmem:[#allocation8 + $0x4c] sm:$0xf]
    %v225 = vld [vmem:[#allocation8 + $0x50] sm:$0xf]
    %v226 = vld [vmem:[#allocation8 + $0x54] sm:$0xf]
    %v227 = vld [vmem:[#allocation8 + $0x58] sm:$0xf]
    %v228 = vld [vmem:[#allocation8 + $0x5c] sm:$0xf]
    %v229 = vld [vmem:[#allocation8 + $0x60] sm:$0xf]
    %v230 = vld [vmem:[#allocation8 + $0x64] sm:$0xf]
    %v231 = vld [vmem:[#allocation8 + $0x68] sm:$0xf]
    %v232 = vld [vmem:[#allocation8 + $0x6c] sm:$0xf]
    %v233 = vld [vmem:[#allocation8 + $0x70] sm:$0xf]
    %v234 = vld [vmem:[#allocation8 + $0x74] sm:$0xf]
    %v235 = vld [vmem:[#allocation8 + $0x78] sm:$0xf]
    %v236 = vld [vmem:[#allocation8 + $0x7c] sm:$0xf]
    %v237 = vld [vmem:[%s7] sm:$0x1]
    %v239 = vlaneseq
    %v240 = vshrl.u32 %v239, 7
    %v241 = vsub.s32 0, %v240
    %v242 = vrot.slane %v237, %v241
    %v276 = vunpack.c.l.b16 %v205
    %v277 = vunpack.c.l.b16 %v206
    %v278 = vunpack.c.l.b16 %v207
    %v279 = vunpack.c.l.b16 %v208
    %v280 = vunpack.c.l.b16 %v209
    %v281 = vunpack.c.l.b16 %v210
    %v282 = vunpack.c.l.b16 %v211
    %v283 = vunpack.c.l.b16 %v212
    %v284 = vunpack.c.l.b16 %v213
    %v285 = vunpack.c.l.b16 %v214
    %v286 = vunpack.c.l.b16 %v215
    %v287 = vunpack.c.l.b16 %v216
    %v288 = vunpack.c.l.b16 %v217
    %v289 = vunpack.c.l.b16 %v218
    %v290 = vunpack.c.l.b16 %v219
    %v291 = vunpack.c.l.b16 %v220
    %v292 = vunpack.c.l.b16 %v221
    %v293 = vunpack.c.l.b16 %v222
    %v294 = vunpack.c.l.b16 %v223
    %v295 = vunpack.c.l.b16 %v224
    %v296 = vunpack.c.l.b16 %v225
    %v297 = vunpack.c.l.b16 %v226
    %v298 = vunpack.c.l.b16 %v227
    %v299 = vunpack.c.l.b16 %v228
    %v300 = vunpack.c.l.b16 %v229
    %v301 = vunpack.c.l.b16 %v230
    %v302 = vunpack.c.l.b16 %v231
    %v303 = vunpack.c.l.b16 %v232
    %v304 = vunpack.c.l.b16 %v233
    %v305 = vunpack.c.l.b16 %v234
    %v306 = vunpack.c.l.b16 %v235
    %v307 = vunpack.c.l.b16 %v236
    %v308 = vpack.c.b16 %v277, %v276
    %v309 = vpack.c.b16 %v279, %v278
    %v310 = vpack.c.b16 %v281, %v280
    %v311 = vpack.c.b16 %v283, %v282
    %v312 = vpack.c.b16 %v285, %v284
    %v313 = vpack.c.b16 %v287, %v286
    %v314 = vpack.c.b16 %v289, %v288
    %v315 = vpack.c.b16 %v291, %v290
    %v316 = vpack.c.b16 %v293, %v292
    %v317 = vpack.c.b16 %v295, %v294
    %v318 = vpack.c.b16 %v297, %v296
    %v319 = vpack.c.b16 %v299, %v298
    %v320 = vpack.c.b16 %v301, %v300
    %v321 = vpack.c.b16 %v303, %v302
    %v322 = vpack.c.b16 %v305, %v304
    %v323 = vpack.c.b16 %v307, %v306
    %340 = vmatprep.subr.bf16.mxu0 0
    %341 = vmatpush1.bf16.msra.mxu0 %v315
    %342 = vmatprep.subr.bf16.mxu0 0
    %343 = vmatpush1.bf16.msra.mxu0 %v314
    %344 = vmatprep.subr.bf16.mxu0 0
    %345 = vmatpush1.bf16.msra.mxu0 %v313
    %346 = vmatprep.subr.bf16.mxu0 0
    %347 = vmatpush1.bf16.msra.mxu0 %v312
    %348 = vmatprep.subr.bf16.mxu0 0
    %349 = vmatpush1.bf16.msra.mxu0 %v311
    %350 = vmatprep.subr.bf16.mxu0 0
    %351 = vmatpush1.bf16.msra.mxu0 %v310
    %352 = vmatprep.subr.bf16.mxu0 0
    %353 = vmatpush1.bf16.msra.mxu0 %v309
    %354 = vmatprep.subr.bf16.mxu0 0
    %355 = vmatpush1.bf16.msra.mxu0 %v308
    %356 = vmatprep.subr.bf16.mxu0 0
    %357 = vmatpush2.bf16.msra.mxu0 %v323
    %358 = vmatprep.subr.bf16.mxu0 0
    %359 = vmatpush2.bf16.msra.mxu0 %v322
    %360 = vmatprep.subr.bf16.mxu0 0
    %361 = vmatpush2.bf16.msra.mxu0 %v321
    %362 = vmatprep.subr.bf16.mxu0 0
    %363 = vmatpush2.bf16.msra.mxu0 %v320
    %364 = vmatprep.subr.bf16.mxu0 0
    %365 = vmatpush2.bf16.msra.mxu0 %v319
    %366 = vmatprep.subr.bf16.mxu0 0
    %367 = vmatpush2.bf16.msra.mxu0 %v318
    %368 = vmatprep.subr.bf16.mxu0 0
    %369 = vmatpush2.bf16.msra.mxu0 %v317
    %370 = vmatprep.subr.bf16.mxu0 0
    %371 = vmatpush2.bf16.msra.mxu0 %v316
    %372 = vmatprep.mubr.bf16.mxu0 %v201
    %373 = vmatmul.mubr.bf16.gmra.mxu0 %v142
    %v374 = vpop.f32.mrf.mxu0
    %v375 = vadd.f32 %v242, %v374
    %v376 = vpop.f32.mrf.mxu0
    %v377 = vpop.f32.mrf.mxu0
    %v378 = vadd.f32 %v242, %v377
    %v379 = vpop.f32.mrf.mxu0
    %380 = vmatprep.mubr.bf16.mxu0 %v202
    %381 = vmatmul.mubr.bf16.gmra.mxu0 %v203
    %v382 = vpop.f32.mrf.mxu0
    %v383 = vadd.f32 %v242, %v382
    %v384 = vpop.f32.mrf.mxu0
    %v385 = vpop.f32.mrf.mxu0
    %v386 = vpop.f32.mrf.mxu0
    %387 = vdwg.mxu0
    %v388 = vmax.f32 %v375, 0.0
    %v389 = vmax.f32 %v378, 0.0
    %v390 = vmax.f32 %v383, 0.0
    %v391 = vpack.c.bf16 %v389, %v388
    %v392 = vpack.c.bf16 %v390, %v390
    %v393 = vld [vmem:[#allocation7] sm:$0xf]
    %v394 = vld [vmem:[#allocation7 + $0x4] sm:$0xf]
    %v397 = vunpack.c.l.b16 %v393
    %v398 = vunpack.c.l.b16 %v394
    %v399 = vpack.c.b16 %v398, %v397
    %vm400 = vcmask 195584
    %v402 = vsel %vm400, %v399, 0
    %vm404 = vcmask 1043456
    %v406 = vsel %vm404, %v392, 0
    %408 = vmatprep.subr.bf16.mxu0 0
    %409 = vmatpush1.bf16.msra.mxu0 0
    %410 = vmatprep.subr.bf16.mxu0 0
    %411 = vmatpush1.bf16.msra.mxu0 0
    %412 = vmatprep.subr.bf16.mxu0 0
    %413 = vmatpush1.bf16.msra.mxu0 0
    %414 = vmatprep.subr.bf16.mxu0 0
    %415 = vmatpush1.bf16.msra.mxu0 0
    %416 = vmatprep.subr.bf16.mxu0 0
    %417 = vmatpush1.bf16.msra.mxu0 0
    %418 = vmatprep.subr.bf16.mxu0 0
    %419 = vmatpush1.bf16.msra.mxu0 0
    %420 = vmatprep.subr.bf16.mxu0 0
    %421 = vmatpush1.bf16.msra.mxu0 %v406
    %422 = vmatprep.subr.bf16.mxu0 0
    %423 = vmatpush1.bf16.msra.mxu0 %v391
    %424 = vmatprep.subr.bf16.mxu0 0
    %425 = vmatpush2.bf16.msra.mxu0 0
    %426 = vmatprep.subr.bf16.mxu0 0
    %427 = vmatpush2.bf16.msra.mxu0 0
    %428 = vmatprep.subr.bf16.mxu0 0
    %429 = vmatpush2.bf16.msra.mxu0 0
    %430 = vmatprep.subr.bf16.mxu0 0
    %431 = vmatpush2.bf16.msra.mxu0 0
    %432 = vmatprep.subr.bf16.mxu0 0
    %433 = vmatpush2.bf16.msra.mxu0 0
    %434 = vmatprep.subr.bf16.mxu0 0
    %435 = vmatpush2.bf16.msra.mxu0 0
    %436 = vmatprep.subr.bf16.mxu0 0
    %437 = vmatpush2.bf16.msra.mxu0 0
    %438 = vmatprep.subr.bf16.mxu0 0
    %439 = vmatpush2.bf16.msra.mxu0 0
    %440 = vmatprep.mubr.bf16.mxu0 0
    %441 = vmatmul.mubr.bf16.gmra.mxu0 %v402
    %v442 = vpop.f32.mrf.mxu0
    %v443 = vadd.f32 0.0, %v442
    %v444 = vpop.f32.mrf.mxu0
    %v445 = vpop.f32.mrf.mxu0
    %v446 = vadd.f32 0.0, %v445
    %v447 = vpop.f32.mrf.mxu0
    %448 = vdwg.mxu0
    %v449 = vpack.c.bf16 %v446, %v443
    %v450 = vld [vmem:[#allocation10] sm:$0xf]
    %v451 = vld [vmem:[#allocation10 + $0x4] sm:$0xf]
    %v452 = vld [vmem:[#allocation10 + $0x8] sm:$0xf]
    %v453 = vld [vmem:[#allocation10 + $0xc] sm:$0xf]
    %v454 = vld [vmem:[#allocation10 + $0x10] sm:$0xf]
    %v455 = vld [vmem:[#allocation10 + $0x14] sm:$0xf]
    %v456 = vld [vmem:[#allocation10 + $0x18] sm:$0xf]
    %v457 = vld [vmem:[#allocation10 + $0x1c] sm:$0xf]
    %v458 = vld [vmem:[#allocation10 + $0x20] sm:$0xf]
    %v459 = vld [vmem:[#allocation10 + $0x24] sm:$0xf]
    %v460 = vld [vmem:[#allocation10 + $0x28] sm:$0xf]
    %v461 = vld [vmem:[#allocation10 + $0x2c] sm:$0xf]
    %v462 = vld [vmem:[#allocation10 + $0x30] sm:$0xf]
    %v463 = vld [vmem:[#allocation10 + $0x34] sm:$0xf]
    %v464 = vld [vmem:[#allocation10 + $0x38] sm:$0xf]
    %v465 = vld [vmem:[#allocation10 + $0x3c] sm:$0xf]
    %v466 = vld [vmem:[#allocation10 + $0x40] sm:$0xf]
    %v467 = vld [vmem:[#allocation10 + $0x44] sm:$0xf]
    %v468 = vld [vmem:[#allocation10 + $0x48] sm:$0xf]
    %v469 = vld [vmem:[#allocation10 + $0x4c] sm:$0xf]
    %v470 = vld [vmem:[#allocation10 + $0x50] sm:$0xf]
    %v471 = vld [vmem:[#allocation10 + $0x54] sm:$0xf]
    %v472 = vld [vmem:[#allocation10 + $0x58] sm:$0xf]
    %v473 = vld [vmem:[#allocation10 + $0x5c] sm:$0xf]
    %v474 = vld [vmem:[#allocation10 + $0x60] sm:$0xf]
    %v475 = vld [vmem:[#allocation10 + $0x64] sm:$0xf]
    %v476 = vld [vmem:[#allocation10 + $0x68] sm:$0xf]
    %v477 = vld [vmem:[#allocation10 + $0x6c] sm:$0xf]
    %v478 = vld [vmem:[#allocation10 + $0x70] sm:$0xf]
    %v479 = vld [vmem:[#allocation10 + $0x74] sm:$0xf]
    %v480 = vld [vmem:[#allocation10 + $0x78] sm:$0xf]
    %v481 = vld [vmem:[#allocation10 + $0x7c] sm:$0xf]
    %v482 = vld [vmem:[%s8] sm:$0x1]
    %v484 = vlaneseq
    %v485 = vshrl.u32 %v484, 7
    %v486 = vsub.s32 0, %v485
    %v487 = vrot.slane %v482, %v486
    %v521 = vunpack.c.l.b16 %v450
    %v522 = vunpack.c.l.b16 %v451
    %v523 = vunpack.c.l.b16 %v452
    %v524 = vunpack.c.l.b16 %v453
    %v525 = vunpack.c.l.b16 %v454
    %v526 = vunpack.c.l.b16 %v455
    %v527 = vunpack.c.l.b16 %v456
    %v528 = vunpack.c.l.b16 %v457
    %v529 = vunpack.c.l.b16 %v458
    %v530 = vunpack.c.l.b16 %v459
    %v531 = vunpack.c.l.b16 %v460
    %v532 = vunpack.c.l.b16 %v461
    %v533 = vunpack.c.l.b16 %v462
    %v534 = vunpack.c.l.b16 %v463
    %v535 = vunpack.c.l.b16 %v464
    %v536 = vunpack.c.l.b16 %v465
    %v537 = vunpack.c.l.b16 %v466
    %v538 = vunpack.c.l.b16 %v467
    %v539 = vunpack.c.l.b16 %v468
    %v540 = vunpack.c.l.b16 %v469
    %v541 = vunpack.c.l.b16 %v470
    %v542 = vunpack.c.l.b16 %v471
    %v543 = vunpack.c.l.b16 %v472
    %v544 = vunpack.c.l.b16 %v473
    %v545 = vunpack.c.l.b16 %v474
    %v546 = vunpack.c.l.b16 %v475
    %v547 = vunpack.c.l.b16 %v476
    %v548 = vunpack.c.l.b16 %v477
    %v549 = vunpack.c.l.b16 %v478
    %v550 = vunpack.c.l.b16 %v479
    %v551 = vunpack.c.l.b16 %v480
    %v552 = vunpack.c.l.b16 %v481
    %v553 = vpack.c.b16 %v522, %v521
    %v554 = vpack.c.b16 %v524, %v523
    %v555 = vpack.c.b16 %v526, %v525
    %v556 = vpack.c.b16 %v528, %v527
    %v557 = vpack.c.b16 %v530, %v529
    %v558 = vpack.c.b16 %v532, %v531
    %v559 = vpack.c.b16 %v534, %v533
    %v560 = vpack.c.b16 %v536, %v535
    %v561 = vpack.c.b16 %v538, %v537
    %v562 = vpack.c.b16 %v540, %v539
    %v563 = vpack.c.b16 %v542, %v541
    %v564 = vpack.c.b16 %v544, %v543
    %v565 = vpack.c.b16 %v546, %v545
    %v566 = vpack.c.b16 %v548, %v547
    %v567 = vpack.c.b16 %v550, %v549
    %v568 = vpack.c.b16 %v552, %v551
    %585 = vmatprep.subr.bf16.mxu0 0
    %586 = vmatpush1.bf16.msra.mxu0 %v560
    %587 = vmatprep.subr.bf16.mxu0 0
    %588 = vmatpush1.bf16.msra.mxu0 %v559
    %589 = vmatprep.subr.bf16.mxu0 0
    %590 = vmatpush1.bf16.msra.mxu0 %v558
    %591 = vmatprep.subr.bf16.mxu0 0
    %592 = vmatpush1.bf16.msra.mxu0 %v557
    %593 = vmatprep.subr.bf16.mxu0 0
    %594 = vmatpush1.bf16.msra.mxu0 %v556
    %595 = vmatprep.subr.bf16.mxu0 0
    %596 = vmatpush1.bf16.msra.mxu0 %v555
    %597 = vmatprep.subr.bf16.mxu0 0
    %598 = vmatpush1.bf16.msra.mxu0 %v554
    %599 = vmatprep.subr.bf16.mxu0 0
    %600 = vmatpush1.bf16.msra.mxu0 %v553
    %601 = vmatprep.subr.bf16.mxu0 0
    %602 = vmatpush2.bf16.msra.mxu0 %v568
    %603 = vmatprep.subr.bf16.mxu0 0
    %604 = vmatpush2.bf16.msra.mxu0 %v567
    %605 = vmatprep.subr.bf16.mxu0 0
    %606 = vmatpush2.bf16.msra.mxu0 %v566
    %607 = vmatprep.subr.bf16.mxu0 0
    %608 = vmatpush2.bf16.msra.mxu0 %v565
    %609 = vmatprep.subr.bf16.mxu0 0
    %610 = vmatpush2.bf16.msra.mxu0 %v564
    %611 = vmatprep.subr.bf16.mxu0 0
    %612 = vmatpush2.bf16.msra.mxu0 %v563
    %613 = vmatprep.subr.bf16.mxu0 0
    %614 = vmatpush2.bf16.msra.mxu0 %v562
    %615 = vmatprep.subr.bf16.mxu0 0
    %616 = vmatpush2.bf16.msra.mxu0 %v561
    %617 = vmatprep.mubr.bf16.mxu0 %v449
    %618 = vmatmul.mubr.bf16.gmra.mxu0 %v391
    %v619 = vpop.f32.mrf.mxu0
    %v620 = vadd.f32 %v487, %v619
    %v621 = vpop.f32.mrf.mxu0
    %v622 = vpop.f32.mrf.mxu0
    %v623 = vadd.f32 %v487, %v622
    %v624 = vpop.f32.mrf.mxu0
    %625 = vdwg.mxu0
    %v626 = vmax.f32 %v620, 0.0
    %v627 = vmax.f32 %v623, 0.0
    %v628 = vpack.c.bf16 %v627, %v626
    %v629 = vld [vmem:[%s3] sm:$0xf]
    %vm630 = vcmask 130048
    %v632 = vsel %vm630, %v629, 0
    %634 = vmatprep.subr.bf16.mxu0 0
    %635 = vmatpush1.bf16.msra.mxu0 0
    %636 = vmatprep.subr.bf16.mxu0 0
    %637 = vmatpush1.bf16.msra.mxu0 0
    %638 = vmatprep.subr.bf16.mxu0 0
    %639 = vmatpush1.bf16.msra.mxu0 0
    %640 = vmatprep.subr.bf16.mxu0 0
    %641 = vmatpush1.bf16.msra.mxu0 0
    %642 = vmatprep.subr.bf16.mxu0 0
    %643 = vmatpush1.bf16.msra.mxu0 0
    %644 = vmatprep.subr.bf16.mxu0 0
    %645 = vmatpush1.bf16.msra.mxu0 0
    %646 = vmatprep.subr.bf16.mxu0 0
    %647 = vmatpush1.bf16.msra.mxu0 0
    %648 = vmatprep.subr.bf16.mxu0 0
    %649 = vmatpush1.bf16.msra.mxu0 %v628
    %650 = vmatprep.subr.bf16.mxu0 0
    %651 = vmatpush2.bf16.msra.mxu0 0
    %652 = vmatprep.subr.bf16.mxu0 0
    %653 = vmatpush2.bf16.msra.mxu0 0
    %654 = vmatprep.subr.bf16.mxu0 0
    %655 = vmatpush2.bf16.msra.mxu0 0
    %656 = vmatprep.subr.bf16.mxu0 0
    %657 = vmatpush2.bf16.msra.mxu0 0
    %658 = vmatprep.subr.bf16.mxu0 0
    %659 = vmatpush2.bf16.msra.mxu0 0
    %660 = vmatprep.subr.bf16.mxu0 0
    %661 = vmatpush2.bf16.msra.mxu0 0
    %662 = vmatprep.subr.bf16.mxu0 0
    %663 = vmatpush2.bf16.msra.mxu0 0
    %664 = vmatprep.subr.bf16.mxu0 0
    %665 = vmatpush2.bf16.msra.mxu0 0
    %666 = vmatprep.mubr.bf16.mxu0 0
    %667 = vmatmul.mubr.bf16.gmra.mxu0 %v632
    %v668 = vpop.f32.mrf.mxu0
    %v669 = vadd.f32 0.0, %v668
    %v670 = vpop.f32.mrf.mxu0
    %v671 = vpop.f32.mrf.mxu0
    %v672 = vpop.f32.mrf.mxu0
    %673 = vdwg.mxu0
    %v674 = vpack.c.bf16 %v669, %v669
    %v675 = vld [vmem:[#allocation11] sm:$0xf]
    %v676 = vld [vmem:[#allocation11 + $0x4] sm:$0xf]
    %v677 = vld [vmem:[#allocation11 + $0x8] sm:$0xf]
    %v678 = vld [vmem:[#allocation11 + $0xc] sm:$0xf]
    %v679 = vld [vmem:[#allocation11 + $0x10] sm:$0xf]
    %v680 = vld [vmem:[#allocation11 + $0x14] sm:$0xf]
    %v681 = vld [vmem:[#allocation11 + $0x18] sm:$0xf]
    %v682 = vld [vmem:[#allocation11 + $0x1c] sm:$0xf]
    %v683 = vld [vmem:[#allocation11 + $0x20] sm:$0xf]
    %v684 = vld [vmem:[#allocation11 + $0x24] sm:$0xf]
    %v685 = vld [vmem:[#allocation11 + $0x28] sm:$0xf]
    %v686 = vld [vmem:[#allocation11 + $0x2c] sm:$0xf]
    %v687 = vld [vmem:[#allocation11 + $0x30] sm:$0xf]
    %v688 = vld [vmem:[#allocation11 + $0x34] sm:$0xf]
    %v689 = vld [vmem:[#allocation11 + $0x38] sm:$0xf]
    %v690 = vld [vmem:[#allocation11 + $0x3c] sm:$0xf]
    %v691 = vld [vmem:[#allocation11 + $0x40] sm:$0xf]
    %v692 = vld [vmem:[#allocation11 + $0x44] sm:$0xf]
    %v693 = vld [vmem:[#allocation11 + $0x48] sm:$0xf]
    %v694 = vld [vmem:[#allocation11 + $0x4c] sm:$0xf]
    %v695 = vld [vmem:[#allocation11 + $0x50] sm:$0xf]
    %v696 = vld [vmem:[#allocation11 + $0x54] sm:$0xf]
    %v697 = vld [vmem:[#allocation11 + $0x58] sm:$0xf]
    %v698 = vld [vmem:[#allocation11 + $0x5c] sm:$0xf]
    %v699 = vld [vmem:[#allocation11 + $0x60] sm:$0xf]
    %v700 = vld [vmem:[#allocation11 + $0x64] sm:$0xf]
    %v701 = vld [vmem:[#allocation11 + $0x68] sm:$0xf]
    %v702 = vld [vmem:[#allocation11 + $0x6c] sm:$0xf]
    %v703 = vld [vmem:[#allocation11 + $0x70] sm:$0xf]
    %v704 = vld [vmem:[#allocation11 + $0x74] sm:$0xf]
    %v705 = vld [vmem:[#allocation11 + $0x78] sm:$0xf]
    %v706 = vld [vmem:[#allocation11 + $0x7c] sm:$0xf]
    %v707 = vld [vmem:[%s9] sm:$0x1]
    %v709 = vlaneseq
    %v710 = vshrl.u32 %v709, 7
    %v711 = vsub.s32 0, %v710
    %v712 = vrot.slane %v707, %v711
    %v746 = vunpack.c.l.b16 %v675
    %v747 = vunpack.c.l.b16 %v676
    %v748 = vunpack.c.l.b16 %v677
    %v749 = vunpack.c.l.b16 %v678
    %v750 = vunpack.c.l.b16 %v679
    %v751 = vunpack.c.l.b16 %v680
    %v752 = vunpack.c.l.b16 %v681
    %v753 = vunpack.c.l.b16 %v682
    %v754 = vunpack.c.l.b16 %v683
    %v755 = vunpack.c.l.b16 %v684
    %v756 = vunpack.c.l.b16 %v685
    %v757 = vunpack.c.l.b16 %v686
    %v758 = vunpack.c.l.b16 %v687
    %v759 = vunpack.c.l.b16 %v688
    %v760 = vunpack.c.l.b16 %v689
    %v761 = vunpack.c.l.b16 %v690
    %v762 = vunpack.c.l.b16 %v691
    %v763 = vunpack.c.l.b16 %v692
    %v764 = vunpack.c.l.b16 %v693
    %v765 = vunpack.c.l.b16 %v694
    %v766 = vunpack.c.l.b16 %v695
    %v767 = vunpack.c.l.b16 %v696
    %v768 = vunpack.c.l.b16 %v697
    %v769 = vunpack.c.l.b16 %v698
    %v770 = vunpack.c.l.b16 %v699
    %v771 = vunpack.c.l.b16 %v700
    %v772 = vunpack.c.l.b16 %v701
    %v773 = vunpack.c.l.b16 %v702
    %v774 = vunpack.c.l.b16 %v703
    %v775 = vunpack.c.l.b16 %v704
    %v776 = vunpack.c.l.b16 %v705
    %v777 = vunpack.c.l.b16 %v706
    %v778 = vpack.c.b16 %v747, %v746
    %v779 = vpack.c.b16 %v749, %v748
    %v780 = vpack.c.b16 %v751, %v750
    %v781 = vpack.c.b16 %v753, %v752
    %v782 = vpack.c.b16 %v755, %v754
    %v783 = vpack.c.b16 %v757, %v756
    %v784 = vpack.c.b16 %v759, %v758
    %v785 = vpack.c.b16 %v761, %v760
    %v786 = vpack.c.b16 %v763, %v762
    %v787 = vpack.c.b16 %v765, %v764
    %v788 = vpack.c.b16 %v767, %v766
    %v789 = vpack.c.b16 %v769, %v768
    %v790 = vpack.c.b16 %v771, %v770
    %v791 = vpack.c.b16 %v773, %v772
    %v792 = vpack.c.b16 %v775, %v774
    %v793 = vpack.c.b16 %v777, %v776
    %810 = vmatprep.subr.bf16.mxu0 0
    %811 = vmatpush1.bf16.msra.mxu0 %v785
    %812 = vmatprep.subr.bf16.mxu0 0
    %813 = vmatpush1.bf16.msra.mxu0 %v784
    %814 = vmatprep.subr.bf16.mxu0 0
    %815 = vmatpush1.bf16.msra.mxu0 %v783
    %816 = vmatprep.subr.bf16.mxu0 0
    %817 = vmatpush1.bf16.msra.mxu0 %v782
    %818 = vmatprep.subr.bf16.mxu0 0
    %819 = vmatpush1.bf16.msra.mxu0 %v781
    %820 = vmatprep.subr.bf16.mxu0 0
    %821 = vmatpush1.bf16.msra.mxu0 %v780
    %822 = vmatprep.subr.bf16.mxu0 0
    %823 = vmatpush1.bf16.msra.mxu0 %v779
    %824 = vmatprep.subr.bf16.mxu0 0
    %825 = vmatpush1.bf16.msra.mxu0 %v778
    %826 = vmatprep.subr.bf16.mxu0 0
    %827 = vmatpush2.bf16.msra.mxu0 %v793
    %828 = vmatprep.subr.bf16.mxu0 0
    %829 = vmatpush2.bf16.msra.mxu0 %v792
    %830 = vmatprep.subr.bf16.mxu0 0
    %831 = vmatpush2.bf16.msra.mxu0 %v791
    %832 = vmatprep.subr.bf16.mxu0 0
    %833 = vmatpush2.bf16.msra.mxu0 %v790
    %834 = vmatprep.subr.bf16.mxu0 0
    %835 = vmatpush2.bf16.msra.mxu0 %v789
    %836 = vmatprep.subr.bf16.mxu0 0
    %837 = vmatpush2.bf16.msra.mxu0 %v788
    %838 = vmatprep.subr.bf16.mxu0 0
    %839 = vmatpush2.bf16.msra.mxu0 %v787
    %840 = vmatprep.subr.bf16.mxu0 0
    %841 = vmatpush2.bf16.msra.mxu0 %v786
    %842 = vmatprep.mubr.bf16.mxu0 %v674
    %843 = vmatmul.mubr.bf16.gmra.mxu0 %v628
    %v844 = vpop.f32.mrf.mxu0
    %v845 = vadd.f32 %v712, %v844
    %v846 = vpop.f32.mrf.mxu0
    %v847 = vpop.f32.mrf.mxu0
    %v848 = vpop.f32.mrf.mxu0
    %849 = vdwg.mxu0
    %850 = vst [vmem:[#allocation13] sm:$0xff] %v845
    // Predicated region
    $region66: #{tpu_custom_call.1} parent=1 // pred_check
      _
    $region67: #{tpu_custom_call.1} parent=1 // pred_check_branch
      %852 = sbr.rel (0) target = $region69
    $region68: #{tpu_custom_call.1} parent=1 // pred_region
      %s854 = ssub.s32 128, 128
      %855 = vsyncadd [#allocation4], %s854
      %s857 = sshll.u32 [#allocation13], 4
      %s858 = int_to_ptr.vmem [resolvable:$true] %s857
      %860 = dma.vmem_to_hbm [thread:$0]  %s858, 128, %s10, [#allocation4]
    $region69: #{tpu_custom_call.1} parent=1 // pred_fallthru
      _
    // Predicated region
    $region70: #{tpu_custom_call.1} parent=1 // pred_check
      _
    $region71: #{tpu_custom_call.1} parent=1 // pred_check_branch
      %862 = sbr.rel (0) target = $region73
    $region72: #{tpu_custom_call.1} parent=1 // pred_region
      %863 = dma.done [#allocation4], 128
    $region73: #{tpu_custom_call.1} parent=1 // pred_fallthru
      _
    %864 = vsyncpa [#allocation3], 1
    %865 = vsyncpa [#allocation6], 1
    %866 = vsyncpa [#allocation9], 1
    %867 = vsyncpa [#allocation12], 1
    %868 = vsyncpa [#allocation4], 1

</llo_original>
